<compile_context>
chip_gen: v7x
topology: tpu7x:2x2x1
jax: 0.10.0
libtpu: 0.0.40
codegen_flags: <defaults>
</compile_context>

<pallas_src>
import math

import jax
import jax.numpy as jnp
from jax.experimental import pallas as pl
from jax.experimental.pallas import tpu as pltpu


def make_rotary_embedding(d_model, max_len=200, dtype=jnp.float32):
    """Deterministic recreation of RotaryPosEmbedding.create_rotary_embedding."""
    assert d_model % 2 == 0
    position = jnp.arange(0, max_len, dtype=dtype)[:, None]                 # [max_len, 1]
    div_term = jnp.exp(
        jnp.arange(0, d_model, 2, dtype=dtype) * -(math.log(10000.0) / d_model)
    )                                                                       # [d_model/2]
    phase = position * div_term                                             # [max_len, d_model/2]
    return jnp.concatenate((jnp.sin(phase), jnp.cos(phase)), axis=-1)       # [max_len, d_model]


def _rotary_kernel(x_ref, ab_ref, p_ref, o_ref):
    # x_ref : (TS, D)      input tile (batch dim squeezed)
    # ab_ref: (2, TS, D)   ab_ref[0] = A, ab_ref[1] = Bt (full-width tables)
    # p_ref : (2, D, D)    constant 0/1 permutation matrices
    # o_ref : (TS, D)      output tile
    x = x_ref[...]
    # De-interleave on the otherwise-idle MXU (exact for 0/1 weights):
    #   y1 = concat(x[..., 0::2], x[..., 1::2]);  y2 = concat(x[..., 1::2], x[..., 0::2])
    y1 = jnp.dot(x, p_ref[0], preferred_element_type=jnp.float32)
    y2 = jnp.dot(x, p_ref[1], preferred_element_type=jnp.float32)
    # Single full-width store of the already-concatenated result.
    o_ref[...] = (y1 * ab_ref[0] + y2 * ab_ref[1]).astype(o_ref.dtype)


def _build_tables(rotary_emb, seq_len, d_model, dtype):
    """Tiny per-position tables + permutation matrices (O(S*D + D^2), built once)."""
    d2 = d_model // 2
    re = rotary_emb[:seq_len, :].astype(jnp.float32)
    re1 = re[..., ::2]
    re2 = re[..., 1::2]
    a = jnp.concatenate((re1, re1), axis=-1)          # [S, D]
    bt = jnp.concatenate((-re2, re2), axis=-1)        # [S, D]
    ab = jnp.stack((a, bt)).astype(dtype)             # [2, S, D]

    cols = jnp.arange(d2)
    even_rows = 2 * cols
    odd_rows = even_rows + 1
    # x @ p0 = concat(x_even, x_odd);  x @ p1 = concat(x_odd, x_even)
    p0 = (jnp.zeros((d_model, d_model), dtype)
          .at[even_rows, cols].set(1)
          .at[odd_rows, cols + d2].set(1))
    p1 = (jnp.zeros((d_model, d_model), dtype)
          .at[odd_rows, cols].set(1)
          .at[even_rows, cols + d2].set(1))
    p = jnp.stack((p0, p1))                           # [2, D, D]
    return ab, p


def _pick_seq_tile(seq_len, d_model, itemsize, target_bytes=1 << 20):
    """Sequence tile: whole S if it fits a ~1 MiB x-block, else a multiple of 8."""
    if seq_len * d_model * itemsize <= target_bytes:
        return seq_len
    ts = (target_bytes // (d_model * itemsize)) // 8 * 8
    return int(max(8, min(ts, seq_len)))


@jax.jit
def rotary_pos_embedding(x, rotary_emb):
    """Forward pass equivalent to RotaryPosEmbedding.forward. x: [B, S, D] -> [B, S, D]."""
    B, S, D = x.shape
    assert D % 2 == 0
    ab, p = _build_tables(rotary_emb, S, D, x.dtype)

    ts = _pick_seq_tile(S, D, x.dtype.itemsize)
    grid = (B, pl.cdiv(S, ts))

    return pl.pallas_call(
        _rotary_kernel,
        out_shape=jax.ShapeDtypeStruct((B, S, D), x.dtype),
        grid=grid,
        in_specs=[
            # x: contiguous (TS, D) tiles, read from HBM exactly once.
            pl.BlockSpec((pl.Squeezed(), ts, D), lambda b, s: (b, s, 0)),
            # Both rotary tables merged into one small input; index ignores b,
            # so it is only re-fetched when the sequence tile changes.
            pl.BlockSpec((2, ts, D), lambda b, s: (0, s, 0)),
            # Constant permutation matrices: constant block index -> fetched once.
            pl.BlockSpec((2, D, D), lambda b, s: (0, 0, 0)),
        ],
        out_specs=pl.BlockSpec((pl.Squeezed(), ts, D), lambda b, s: (b, s, 0)),
        compiler_params=pltpu.CompilerParams(
            dimension_semantics=("parallel", "parallel"),
        ),
    )(x, ab, p)


if __name__ == "__main__":
    key = jax.random.PRNGKey(0)
    B, S, D = 2, 8, 32          # batch, seq_len, d_model (d_model even)
    MAX_LEN = 200

    x = jax.random.normal(key, (B, S, D), dtype=jnp.float32)
    rotary_table = make_rotary_embedding(D, max_len=MAX_LEN)

    out = rotary_pos_embedding(x, rotary_table)
    out = jax.block_until_ready(out)

    # Pure-JAX reference mirroring PyTorch apply_rotary_embedding exactly.
    x1, x2 = x[..., ::2], x[..., 1::2]
    re = rotary_table[:S, :]
    re1, re2 = re[..., ::2], re[..., 1::2]
    ref = jnp.concatenate((x1 * re1 - x2 * re2, x1 * re2 + x2 * re1), axis=-1)

    assert out.shape == (B, S, D)
    assert jnp.allclose(out, ref, atol=1e-5, rtol=1e-5), "mismatch vs reference"
    print("KERNEL_OK")
</pallas_src>

<mosaic_0001>
module attributes {stable_mosaic.version = 11 : i64} {
  func.func @_rotary_kernel(%arg0: i32, %arg1: i32, %arg2: memref<1x8x32xf32, #tpu.memory_space<vmem>>, %arg3: memref<2x8x32xf32, #tpu.memory_space<vmem>>, %arg4: memref<2x32x32xf32, #tpu.memory_space<vmem>>, %arg5: memref<1x8x32xf32, #tpu.memory_space<vmem>>) attributes {dimension_semantics = [#tpu.dimension_semantics<parallel>, #tpu.dimension_semantics<parallel>], iteration_bounds = array<i64: 2, 1>, scalar_prefetch = 0 : i64, scratch_operands = 0 : i64, tpu.core_type = #tpu.core_type<tc>, window_params = [{transform_indices = @transform_0, window_bounds = array<i64: 1, 8, 32>}, {transform_indices = @transform_1, window_bounds = array<i64: 2, 8, 32>}, {pipeline_mode = #tpu.pipeline_mode<synchronous>, transform_indices = @transform_2, window_bounds = array<i64: 2, 32, 32>}, {transform_indices = @transform_3, window_bounds = array<i64: 1, 8, 32>}]} {
    %c0 = arith.constant 0 : index
    %c0_0 = arith.constant 0 : index
    %c0_1 = arith.constant 0 : index
    %0 = vector.load %arg2[%c0, %c0_0, %c0_1] : memref<1x8x32xf32, #tpu.memory_space<vmem>>, vector<1x8x32xf32>
    %1 = vector.shape_cast %0 : vector<1x8x32xf32> to vector<8x32xf32>
    %c0_2 = arith.constant 0 : index
    %c0_3 = arith.constant 0 : index
    %c0_4 = arith.constant 0 : index
    %2 = vector.load %arg4[%c0_2, %c0_3, %c0_4] : memref<2x32x32xf32, #tpu.memory_space<vmem>>, vector<1x32x32xf32>
    %3 = vector.shape_cast %2 : vector<1x32x32xf32> to vector<32x32xf32>
    %cst = arith.constant dense<0.000000e+00> : vector<8x32xf32>
    %4 = tpu.matmul %1, %3, %cst {dimension_numbers = #tpu.dot_dimension_numbers<[1], [0], [0], [1], [0, 0, 1, 1], [], []>} : vector<8x32xf32>, vector<32x32xf32>, vector<8x32xf32> -> vector<8x32xf32>
    %c1 = arith.constant 1 : index
    %c0_5 = arith.constant 0 : index
    %c0_6 = arith.constant 0 : index
    %5 = vector.load %arg4[%c1, %c0_5, %c0_6] : memref<2x32x32xf32, #tpu.memory_space<vmem>>, vector<1x32x32xf32>
    %6 = vector.shape_cast %5 : vector<1x32x32xf32> to vector<32x32xf32>
    %cst_7 = arith.constant dense<0.000000e+00> : vector<8x32xf32>
    %7 = tpu.matmul %1, %6, %cst_7 {dimension_numbers = #tpu.dot_dimension_numbers<[1], [0], [0], [1], [0, 0, 1, 1], [], []>} : vector<8x32xf32>, vector<32x32xf32>, vector<8x32xf32> -> vector<8x32xf32>
    %c0_8 = arith.constant 0 : index
    %c0_9 = arith.constant 0 : index
    %c0_10 = arith.constant 0 : index
    %8 = vector.load %arg3[%c0_8, %c0_9, %c0_10] : memref<2x8x32xf32, #tpu.memory_space<vmem>>, vector<1x8x32xf32>
    %9 = vector.shape_cast %8 : vector<1x8x32xf32> to vector<8x32xf32>
    %10 = arith.mulf %4, %9 : vector<8x32xf32>
    %c1_11 = arith.constant 1 : index
    %c0_12 = arith.constant 0 : index
    %c0_13 = arith.constant 0 : index
    %11 = vector.load %arg3[%c1_11, %c0_12, %c0_13] : memref<2x8x32xf32, #tpu.memory_space<vmem>>, vector<1x8x32xf32>
    %12 = vector.shape_cast %11 : vector<1x8x32xf32> to vector<8x32xf32>
    %13 = arith.mulf %7, %12 : vector<8x32xf32>
    %14 = arith.addf %10, %13 : vector<8x32xf32>
    %c0_14 = arith.constant 0 : index
    %c0_15 = arith.constant 0 : index
    %c0_16 = arith.constant 0 : index
    %15 = vector.load %arg5[%c0_14, %c0_15, %c0_16] : memref<1x8x32xf32, #tpu.memory_space<vmem>>, vector<1x8x32xf32>
    %16 = vector.shape_cast %15 : vector<1x8x32xf32> to vector<8x32xf32>
    %17 = vector.shape_cast %14 : vector<8x32xf32> to vector<1x8x32xf32>
    tpu.vector_store %arg5[%c0_14, %c0_15, %c0_16], %17 {strides = array<i32>} : memref<1x8x32xf32, #tpu.memory_space<vmem>>, vector<1x8x32xf32>,
    return
  }
  func.func @transform_0(%arg0: i32, %arg1: i32) -> (i32, i32, i32) {
    %c0_i32 = arith.constant 0 : i32
    %c0_i32_0 = arith.constant 0 : i32
    return %arg0, %arg1, %c0_i32 : i32, i32, i32
  }
  func.func @transform_1(%arg0: i32, %arg1: i32) -> (i32, i32, i32) {
    %c0_i32 = arith.constant 0 : i32
    %c0_i32_0 = arith.constant 0 : i32
    %c0_i32_1 = arith.constant 0 : i32
    return %c0_i32, %arg1, %c0_i32_0 : i32, i32, i32
  }
  func.func @transform_2(%arg0: i32, %arg1: i32) -> (i32, i32, i32) {
    %c0_i32 = arith.constant 0 : i32
    %c0_i32_0 = arith.constant 0 : i32
    %c0_i32_1 = arith.constant 0 : i32
    %c0_i32_2 = arith.constant 0 : i32
    return %c0_i32, %c0_i32_0, %c0_i32_1 : i32, i32, i32
  }
  func.func @transform_3(%arg0: i32, %arg1: i32) -> (i32, i32, i32) {
    %c0_i32 = arith.constant 0 : i32
    %c0_i32_0 = arith.constant 0 : i32
    return %arg0, %arg1, %c0_i32 : i32, i32, i32
  }
}

</mosaic_0001>

<llo_original>
// kernel: neg.1
$region0: #{neg.1}
  #allocation0 [shape = 's32[1]{0}', space=sflag, size = 0x4, scoped, tag = 'scoped memory for neg.1']
  %s0 = inlined_call_operand.vmem [shape: f32[8,16], index: 0, kind: input, shape index: {}]
  %s1 = inlined_call_operand.vmem [shape: f32[8,16], index: 1, kind: output, shape index: {}]
  %v2 = vld [vmem:[%s0] sm:$0xff]
  %3 = xla_tuple %v2
  %4 = xla_tuple %3
  %v5 = vxor.u32 %v2, 2147483648
  %6 = xla_tuple %v5
  %7 = vst [vmem:[%s1] sm:$0xff] %v5

// kernel: rotary_pos_embedding.1
$region0: #{rotary_pos_embedding.1}
  #allocation0 [shape = 'u32[]', space=smem, size = 0x4, offset = 0x4, fixed_abs, tag = 'smem constant byte address 0x4 - core index']
  #allocation1 [shape = 'u32[144,128]{1,0:T(1,128)}', space=vmem, size = 0x12000, scoped, tag = 'internal scratch']
  %s0 = inlined_call_operand.vmem [shape: f32[2,8,32], index: 0, kind: input, shape index: {}]
  %s1 = inlined_call_operand.vmem [shape: f32[2,8,32], index: 1, kind: input, shape index: {}]
  %s2 = inlined_call_operand.vmem [shape: f32[2,32,32], index: 2, kind: input, shape index: {}]
  %s3 = inlined_call_operand.hbm [shape: f32[2,8,32], index: 3, kind: output, shape index: {}]
  %s4 = sld [smem:[#allocation0]]
  $region45: #{rotary_pos_embedding.1} parent=0
    _
  %s6 = ssub.s32 1, %s4
  %s7 = scalar_select 0, %s6, %s4
  $region1: #{rotary_pos_embedding.1} parent=0
    #allocation2 [shape = 'u8[8192]{0}', space=vmem, size = 0x2000, scoped, tag = 'output window, operand 0']
    #allocation3 [shape = 's32[2]{0}', space=sflag, size = 0x8, scoped, tag = 'scoped memory for rotary_pos_embedding.1']
    %8 = vsyncpa [#allocation3], 0
    %s9 = scalar_lea.sflag [#allocation3], 1
    %10 = vsyncpa %s9, 0
    loop: start=0, step=1, limit=4
    $region2: #{rotary_pos_embedding.1} parent=1 // loop_pre_header
      _
    $region3: #{rotary_pos_embedding.1} parent=1 // loop_header
      %s12 = sphi 0, %s16
      %p13 = scmp.ge.s32.totalorder %s12, 4
      %s19 = sphi 0, %s31
      %s20 = sphi 0, %s27
      %s21 = sphi 0, %s19
      %s22 = sphi 0, %s20
      %s23 = sphi 0, %s21
      %s24 = sphi 0, %s22
      %s36 = sphi 0, %s38
      %s39 = sphi 0, %s36
      %s40 = sphi 0, %s39
      %s56 = sphi 0, %s40
      %s62 = sphi 0, %s64
      %s65 = sphi 0, %s62
      %s66 = sphi 0, %s65
      %s82 = sphi 0, %s66
      %s86 = sphi 0, %s86
      %s88 = sphi 0, %s86
      %s89 = sphi 0, %s88
      %s103 = sphi 0, %s89
      %s111 = sphi 0, %s113
      %s114 = sphi 0, %s111
      %s115 = sphi 0, %s114
      %s131 = sphi 0, %s115
    $region4: #{rotary_pos_embedding.1} parent=1 // loop_header_branch
      %15 = sbr.rel (%p13) target = $region8
    $region5: #{rotary_pos_embedding.1} parent=1 // loop_body
      %s17 = ssub.s32 %s12, 1
      %s18 = ssub.s32 %s12, 2
      %s25 = sadd.s32 1, %s20
      %p26 = scmp.ge.s32.totalorder %s25, 1
      %s27 = scalar_select %p26, 0, %s25
      %s28 = sadd.s32 1, %s19
      %s29 = scalar_select %p26, %s28, %s19
      %p30 = scmp.ge.s32.totalorder %s29, 2
      %s31 = scalar_select %p30, 0, %s29
      %s32 = ssub.s32 %s19, %s31
      %s33 = ssub.s32 %s20, %s27
      %s34 = sor.u32 %s32, %s33
      %p35 = scmp.eq.s32.totalorder %s34, 0
      %s37 = sadd.s32 %s36, 1
      %s38 = scalar_select %p35, %s36, %s37
      %p41 = pneg %p35
      %p42 = scmp.eq.s32.totalorder %s12, 1
      %p43 = por %p41, %p42
      %p44 = scmp.ne.s32.totalorder %s36, %s39
      %p45 = scmp.eq.s32.totalorder %s12, 0
      %p46 = por %p44, %p45
      %p47 = scmp.ne.s32.totalorder %s36, %s39
      %p48 = scmp.eq.s32.totalorder %s17, 1
      %p49 = por %p47, %p48
      %p50 = scmp.ne.s32.totalorder %s39, %s40
      %p51 = scmp.eq.s32.totalorder %s17, 0
      %p52 = por %p50, %p51
      %p53 = scmp.ne.s32.totalorder %s39, %s40
      %p54 = scmp.eq.s32.totalorder %s18, 1
      %p55 = por %p53, %p54
      %p57 = scmp.ne.s32.totalorder %s40, %s56
      %p58 = scmp.eq.s32.totalorder %s18, 0
      %p59 = por %p57, %p58
      %s60 = ssub.s32 %s20, %s27
      %p61 = scmp.eq.s32.totalorder %s60, 0
      %s63 = sadd.s32 %s62, 1
      %s64 = scalar_select %p61, %s62, %s63
      %p67 = pneg %p61
      %p68 = scmp.eq.s32.totalorder %s12, 1
      %p69 = por %p67, %p68
      %p70 = scmp.ne.s32.totalorder %s62, %s65
      %p71 = scmp.eq.s32.totalorder %s12, 0
      %p72 = por %p70, %p71
      %p73 = scmp.ne.s32.totalorder %s62, %s65
      %p74 = scmp.eq.s32.totalorder %s17, 1
      %p75 = por %p73, %p74
      %p76 = scmp.ne.s32.totalorder %s65, %s66
      %p77 = scmp.eq.s32.totalorder %s17, 0
      %p78 = por %p76, %p77
      %p79 = scmp.ne.s32.totalorder %s65, %s66
      %p80 = scmp.eq.s32.totalorder %s18, 1
      %p81 = por %p79, %p80
      %p83 = scmp.ne.s32.totalorder %s66, %s82
      %p84 = scmp.eq.s32.totalorder %s18, 0
      %p85 = por %p83, %p84
      %s87 = sadd.s32 %s86, 1
      %p90 = scmp.eq.s32.totalorder %s12, 1
      %p91 = scmp.ne.s32.totalorder %s86, %s88
      %p92 = scmp.eq.s32.totalorder %s12, 0
      %p93 = por %p91, %p92
      %p94 = scmp.ne.s32.totalorder %s86, %s88
      %p95 = scmp.eq.s32.totalorder %s17, 1
      %p96 = por %p94, %p95
      %p97 = scmp.ne.s32.totalorder %s88, %s89
      %p98 = scmp.eq.s32.totalorder %s17, 0
      %p99 = por %p97, %p98
      %p100 = scmp.ne.s32.totalorder %s88, %s89
      %p101 = scmp.eq.s32.totalorder %s18, 1
      %p102 = por %p100, %p101
      %p104 = scmp.ne.s32.totalorder %s89, %s103
      %p105 = scmp.eq.s32.totalorder %s18, 0
      %p106 = por %p104, %p105
      %s107 = ssub.s32 %s19, %s31
      %s108 = ssub.s32 %s20, %s27
      %s109 = sor.u32 %s107, %s108
      %p110 = scmp.eq.s32.totalorder %s109, 0
      %s112 = sadd.s32 %s111, 1
      %s113 = scalar_select %p110, %s111, %s112
      %p116 = pneg %p110
      %p117 = scmp.eq.s32.totalorder %s12, 1
      %p118 = por %p116, %p117
      %p119 = scmp.ne.s32.totalorder %s111, %s114
      %p120 = scmp.eq.s32.totalorder %s12, 0
      %p121 = por %p119, %p120
      %p122 = scmp.ne.s32.totalorder %s111, %s114
      %p123 = scmp.eq.s32.totalorder %s17, 1
      %p124 = por %p122, %p123
      %p125 = scmp.ne.s32.totalorder %s114, %s115
      %p126 = scmp.eq.s32.totalorder %s17, 0
      %p127 = por %p125, %p126
      %p128 = scmp.ne.s32.totalorder %s114, %s115
      %p129 = scmp.eq.s32.totalorder %s18, 1
      %p130 = por %p128, %p129
      %p132 = scmp.ne.s32.totalorder %s115, %s131
      %p133 = scmp.eq.s32.totalorder %s18, 0
      %p134 = por %p132, %p133
      %p135 = scmp.le.s32.totalorder 1, %s12
      %p136 = scmp.lt.s32.totalorder %s12, 3
      %p137 = pnand %p135, %p136
      %p138 = pneg %p137
      // Predicated region
      $region9: #{rotary_pos_embedding.1} parent=5 // pred_check
        _
      $region10: #{rotary_pos_embedding.1} parent=5 // pred_check_branch
        %140 = sbr.rel (%p137) target = $region12
      $region11: #{rotary_pos_embedding.1} parent=5 // pred_region
        %s141 = ssub.s32 %s12, 1
        // Predicated region
        $region13: #{rotary_pos_embedding.1} parent=11 // pred_check
          %p142 = pneg %p78
        $region14: #{rotary_pos_embedding.1} parent=11 // pred_check_branch
          %144 = sbr.rel (%p142) target = $region16
        $region15: #{rotary_pos_embedding.1} parent=11 // pred_region
          %p145 = scmp.lt.s32.totalorder %s22, 0
          %s146 = scalar_select %p145, %s22, 0
          %s147 = smul.addr %s146, 8
          %s148 = scalar_lea.vmem %s1, %s147
        $region16: #{rotary_pos_embedding.1} parent=11 // pred_fallthru
          _
        // Predicated region
        $region17: #{rotary_pos_embedding.1} parent=11 // pred_check
          %p149 = pneg %p99
        $region18: #{rotary_pos_embedding.1} parent=11 // pred_check_branch
          %151 = sbr.rel (%p149) target = $region20
        $region19: #{rotary_pos_embedding.1} parent=11 // pred_region
          _
        $region20: #{rotary_pos_embedding.1} parent=11 // pred_fallthru
          _
      $region12: #{rotary_pos_embedding.1} parent=5 // pred_fallthru
        _
      %p152 = scmp.lt.s32.totalorder %s12, 2
      // Predicated region
      $region21: #{rotary_pos_embedding.1} parent=5 // pred_check
        %p153 = pneg %p152
      $region22: #{rotary_pos_embedding.1} parent=5 // pred_check_branch
        %155 = sbr.rel (%p153) target = $region24
      $region23: #{rotary_pos_embedding.1} parent=5 // pred_region
        // Predicated region
        $region25: #{rotary_pos_embedding.1} parent=23 // pred_check
          %p156 = pneg %p46
        $region26: #{rotary_pos_embedding.1} parent=23 // pred_check_branch
          %158 = sbr.rel (%p156) target = $region28
        $region27: #{rotary_pos_embedding.1} parent=23 // pred_region
          %p159 = scmp.lt.s32.totalorder %s19, 1
          %s160 = scalar_select %p159, %s19, 1
          %p161 = scmp.lt.s32.totalorder %s20, 0
          %s162 = scalar_select %p161, %s20, 0
          %s163 = sadd.s32 %s162, %s160
          %s164 = smul.addr %s163, 8
          %s165 = scalar_lea.vmem %s0, %s164
        $region28: #{rotary_pos_embedding.1} parent=23 // pred_fallthru
          _
      $region24: #{rotary_pos_embedding.1} parent=5 // pred_fallthru
        _
      %p166 = scmp.le.s32.totalorder 1, %s12
      %p167 = scmp.lt.s32.totalorder %s12, 3
      %p168 = pnand %p166, %p167
      %p169 = pneg %p168
      // Predicated region
      $region29: #{rotary_pos_embedding.1} parent=5 // pred_check
        _
      $region30: #{rotary_pos_embedding.1} parent=5 // pred_check_branch
        %171 = sbr.rel (%p168) target = $region32
      $region31: #{rotary_pos_embedding.1} parent=5 // pred_region
        %s172 = ssub.s32 %s12, 1
        %p173 = scmp.lt.s32.totalorder %s21, 1
        %s174 = scalar_select %p173, %s21, 1
        %p175 = scmp.lt.s32.totalorder %s22, 0
        %s176 = scalar_select %p175, %s22, 0
        %s177 = sadd.s32 %s176, %s174
        %s178 = smul.addr %s177, 8
        %s179 = scalar_lea.vmem %s0, %s178
        %p180 = pneg %p52
        %p181 = pneg %p49
        %p182 = scmp.lt.s32.totalorder %s22, 0
        %s183 = scalar_select %p182, %s22, 0
        %s184 = smul.addr %s183, 8
        %s185 = scalar_lea.vmem %s1, %s184
        %p186 = pneg %p78
        %p187 = pneg %p75
        %p188 = pneg %p99
        %p189 = pneg %p96
        %p190 = pneg %p127
        %p191 = pneg %p124
        %s192 = sand.u32 %s114, 1
        %s193 = scalar_lea.sflag [#allocation3], %s192
        %s194 = sand.u32 %s114, 1
        %s195 = smul.addr %s194, 8
        %s196 = scalar_lea.vmem [#allocation2], %s195
        %p197 = scmp.lt.s32.totalorder %s21, 1
        %s198 = scalar_select %p197, %s21, 1
        %p199 = scmp.lt.s32.totalorder %s22, 0
        %s200 = scalar_select %p199, %s22, 0
        %s201 = sadd.s32 %s200, %s198
        %s202 = smul.addr %s201, 8
        %s203 = scalar_lea.vmem %s0, %s202
        %p204 = scmp.lt.s32.totalorder %s22, 0
        %s205 = scalar_select %p204, %s22, 0
        %s206 = smul.addr %s205, 8
        %s207 = scalar_lea.vmem %s1, %s206
        %v208 = vld [vmem:[%s203] sm:$0xff]
        %v209 = vld [vmem:[%s2] sm:$0xff]
        %v210 = vld [vmem:[%s2 + $0x8] sm:$0xff]
        %v211 = vld [vmem:[%s2 + $0x10] sm:$0xff]
        %v212 = vld [vmem:[%s2 + $0x18] sm:$0xff]
        %vm213 = vcmask 261120
        %v215 = vsel %vm213, %v208, 0
        %217 = vmatprep.subr.mxu0 0.0
        %218 = vmatpush1.msra.mxu0 %v209
        %219 = vmatprep.subr.mxu0 0.0
        %220 = vmatpush1.msra.mxu0 %v210
        %221 = vmatprep.subr.mxu0 0.0
        %222 = vmatpush1.msra.mxu0 %v211
        %223 = vmatprep.subr.mxu0 0.0
        %224 = vmatpush1.msra.mxu0 %v212
        %225 = vmatprep.subr.mxu0 0.0
        %226 = vmatpush1.msra.mxu0 0.0
        %227 = vmatprep.subr.mxu0 0.0
        %228 = vmatpush1.msra.mxu0 0.0
        %229 = vmatprep.subr.mxu0 0.0
        %230 = vmatpush1.msra.mxu0 0.0
        %231 = vmatprep.subr.mxu0 0.0
        %232 = vmatpush1.msra.mxu0 0.0
        %233 = vmatprep.subr.mxu0 0.0
        %234 = vmatpush1.msra.mxu0 0.0
        %235 = vmatprep.subr.mxu0 0.0
        %236 = vmatpush1.msra.mxu0 0.0
        %237 = vmatprep.subr.mxu0 0.0
        %238 = vmatpush1.msra.mxu0 0.0
        %239 = vmatprep.subr.mxu0 0.0
        %240 = vmatpush1.msra.mxu0 0.0
        %241 = vmatprep.subr.mxu0 0.0
        %242 = vmatpush1.msra.mxu0 0.0
        %243 = vmatprep.subr.mxu0 0.0
        %244 = vmatpush1.msra.mxu0 0.0
        %245 = vmatprep.subr.mxu0 0.0
        %246 = vmatpush1.msra.mxu0 0.0
        %247 = vmatprep.subr.mxu0 0.0
        %248 = vmatpush1.msra.mxu0 0.0
        %249 = vmatprep.subr.mxu0 0.0
        %250 = vmatpush1.msra.mxu0 0.0
        %251 = vmatprep.subr.mxu0 0.0
        %252 = vmatpush1.msra.mxu0 0.0
        %253 = vmatprep.subr.mxu0 0.0
        %254 = vmatpush1.msra.mxu0 0.0
        %255 = vmatprep.subr.mxu0 0.0
        %256 = vmatpush1.msra.mxu0 0.0
        %257 = vmatprep.subr.mxu0 0.0
        %258 = vmatpush1.msra.mxu0 0.0
        %259 = vmatprep.subr.mxu0 0.0
        %260 = vmatpush1.msra.mxu0 0.0
        %261 = vmatprep.subr.mxu0 0.0
        %262 = vmatpush1.msra.mxu0 0.0
        %263 = vmatprep.subr.mxu0 0.0
        %264 = vmatpush1.msra.mxu0 0.0
        %265 = vmatprep.subr.mxu0 0.0
        %266 = vmatpush1.msra.mxu0 0.0
        %267 = vmatprep.subr.mxu0 0.0
        %268 = vmatpush1.msra.mxu0 0.0
        %269 = vmatprep.subr.mxu0 0.0
        %270 = vmatpush1.msra.mxu0 0.0
        %271 = vmatprep.subr.mxu0 0.0
        %272 = vmatpush1.msra.mxu0 0.0
        %273 = vmatprep.subr.mxu0 0.0
        %274 = vmatpush1.msra.mxu0 0.0
        %275 = vmatprep.subr.mxu0 0.0
        %276 = vmatpush1.msra.mxu0 0.0
        %277 = vmatprep.subr.mxu0 0.0
        %278 = vmatpush1.msra.mxu0 0.0
        %279 = vmatprep.subr.mxu0 0.0
        %280 = vmatpush1.msra.mxu0 0.0
        %281 = vmatprep.mubr.f32.mxu0 0.0
        %282 = vmatmul.mubr.f32.gmra.mrb[0].mxu0 %v215
        %v283 = vpop.f32.mrb[0].mxu0
        %v284 = vadd.f32 0.0, %v283
        %v285 = vpop.f32.mrb[0].mxu0
        %286 = vdwg.mxu0
        %s287 = scalar_lea.vmem %s2, 32
        %v288 = vld [vmem:[%s287] sm:$0xff]
        %v289 = vld [vmem:[%s287 + $0x8] sm:$0xff]
        %v290 = vld [vmem:[%s287 + $0x10] sm:$0xff]
        %v291 = vld [vmem:[%s287 + $0x18] sm:$0xff]
        %292 = vmatprep.subr.mxu0 0.0
        %293 = vmatpush1.msra.mxu0 %v288
        %294 = vmatprep.subr.mxu0 0.0
        %295 = vmatpush1.msra.mxu0 %v289
        %296 = vmatprep.subr.mxu0 0.0
        %297 = vmatpush1.msra.mxu0 %v290
        %298 = vmatprep.subr.mxu0 0.0
        %299 = vmatpush1.msra.mxu0 %v291
        %300 = vmatprep.subr.mxu0 0.0
        %301 = vmatpush1.msra.mxu0 0.0
        %302 = vmatprep.subr.mxu0 0.0
        %303 = vmatpush1.msra.mxu0 0.0
        %304 = vmatprep.subr.mxu0 0.0
        %305 = vmatpush1.msra.mxu0 0.0
        %306 = vmatprep.subr.mxu0 0.0
        %307 = vmatpush1.msra.mxu0 0.0
        %308 = vmatprep.subr.mxu0 0.0
        %309 = vmatpush1.msra.mxu0 0.0
        %310 = vmatprep.subr.mxu0 0.0
        %311 = vmatpush1.msra.mxu0 0.0
        %312 = vmatprep.subr.mxu0 0.0
        %313 = vmatpush1.msra.mxu0 0.0
        %314 = vmatprep.subr.mxu0 0.0
        %315 = vmatpush1.msra.mxu0 0.0
        %316 = vmatprep.subr.mxu0 0.0
        %317 = vmatpush1.msra.mxu0 0.0
        %318 = vmatprep.subr.mxu0 0.0
        %319 = vmatpush1.msra.mxu0 0.0
        %320 = vmatprep.subr.mxu0 0.0
        %321 = vmatpush1.msra.mxu0 0.0
        %322 = vmatprep.subr.mxu0 0.0
        %323 = vmatpush1.msra.mxu0 0.0
        %324 = vmatprep.subr.mxu0 0.0
        %325 = vmatpush1.msra.mxu0 0.0
        %326 = vmatprep.subr.mxu0 0.0
        %327 = vmatpush1.msra.mxu0 0.0
        %328 = vmatprep.subr.mxu0 0.0
        %329 = vmatpush1.msra.mxu0 0.0
        %330 = vmatprep.subr.mxu0 0.0
        %331 = vmatpush1.msra.mxu0 0.0
        %332 = vmatprep.subr.mxu0 0.0
        %333 = vmatpush1.msra.mxu0 0.0
        %334 = vmatprep.subr.mxu0 0.0
        %335 = vmatpush1.msra.mxu0 0.0
        %336 = vmatprep.subr.mxu0 0.0
        %337 = vmatpush1.msra.mxu0 0.0
        %338 = vmatprep.subr.mxu0 0.0
        %339 = vmatpush1.msra.mxu0 0.0
        %340 = vmatprep.subr.mxu0 0.0
        %341 = vmatpush1.msra.mxu0 0.0
        %342 = vmatprep.subr.mxu0 0.0
        %343 = vmatpush1.msra.mxu0 0.0
        %344 = vmatprep.subr.mxu0 0.0
        %345 = vmatpush1.msra.mxu0 0.0
        %346 = vmatprep.subr.mxu0 0.0
        %347 = vmatpush1.msra.mxu0 0.0
        %348 = vmatprep.subr.mxu0 0.0
        %349 = vmatpush1.msra.mxu0 0.0
        %350 = vmatprep.subr.mxu0 0.0
        %351 = vmatpush1.msra.mxu0 0.0
        %352 = vmatprep.subr.mxu0 0.0
        %353 = vmatpush1.msra.mxu0 0.0
        %354 = vmatprep.subr.mxu0 0.0
        %355 = vmatpush1.msra.mxu0 0.0
        %356 = vmatprep.mubr.f32.mxu0 0.0
        %357 = vmatmul.mubr.f32.gmra.mrb[0].mxu0 %v215
        %v358 = vpop.f32.mrb[0].mxu0
        %v359 = vadd.f32 0.0, %v358
        %v360 = vpop.f32.mrb[0].mxu0
        %361 = vdwg.mxu0
        %v362 = vld [vmem:[%s207] sm:$0xff]
        %v363 = vmul.f32 %v284, %v362
        %s364 = scalar_lea.vmem %s207, 8
        %v365 = vld [vmem:[%s364] sm:$0xff]
        %v366 = vmul.f32 %v359, %v365
        %v367 = vadd.f32 %v363, %v366
        %368 = vst.msk [vmem:[%s196] sm:$0xff] %vm213, %v367
        %s369 = sand.u32 %s114, 1
        %s370 = scalar_lea.sflag [#allocation3], %s369
        %s371 = sand.u32 %s114, 1
        %s372 = smul.addr %s371, 8
        %s373 = scalar_lea.vmem [#allocation2], %s372
        // Predicated region
        $region33: #{rotary_pos_embedding.1} parent=31 // pred_check
          %p374 = pneg %p124
        $region34: #{rotary_pos_embedding.1} parent=31 // pred_check_branch
          %376 = sbr.rel (%p374) target = $region36
        $region35: #{rotary_pos_embedding.1} parent=31 // pred_region
          %s378 = ssub.s32 128, 128
          %379 = vsyncadd %s370, %s378
          %s380 = sadd.s32 %s22, %s21
          %s381 = smul.addr %s380, 128
          %s382 = scalar_lea.hbm %s3, %s381
          %s384 = sshll.u32 %s373, 4
          %s385 = int_to_ptr.vmem [resolvable:$true] %s384
          %387 = dma.vmem_to_hbm [thread:$0]  %s385, 128, %s382, %s370
        $region36: #{rotary_pos_embedding.1} parent=31 // pred_fallthru
          _
      $region32: #{rotary_pos_embedding.1} parent=5 // pred_fallthru
        _
      %p388 = scmp.le.s32.totalorder 2, %s12
      // Predicated region
      $region37: #{rotary_pos_embedding.1} parent=5 // pred_check
        %p389 = pneg %p388
      $region38: #{rotary_pos_embedding.1} parent=5 // pred_check_branch
        %391 = sbr.rel (%p389) target = $region40
      $region39: #{rotary_pos_embedding.1} parent=5 // pred_region
        %s392 = ssub.s32 %s12, 2
        // Predicated region
        $region41: #{rotary_pos_embedding.1} parent=39 // pred_check
          %p393 = pneg %p130
        $region42: #{rotary_pos_embedding.1} parent=39 // pred_check_branch
          %395 = sbr.rel (%p393) target = $region44
        $region43: #{rotary_pos_embedding.1} parent=39 // pred_region
          %s396 = sand.u32 %s115, 1
          %s397 = scalar_lea.sflag [#allocation3], %s396
          %s398 = sand.u32 %s115, 1
          %s399 = smul.addr %s398, 8
          %s400 = scalar_lea.vmem [#allocation2], %s399
          %401 = dma.done %s397, 128
        $region44: #{rotary_pos_embedding.1} parent=39 // pred_fallthru
          _
      $region40: #{rotary_pos_embedding.1} parent=5 // pred_fallthru
        _
    $region6: #{rotary_pos_embedding.1} parent=1 // loop_footer
      %s16 = sadd.s32 1, %s12
    $region7: #{rotary_pos_embedding.1} parent=1 // loop_footer_branch
      %11 = sbr.rel target = $region3
    $region8: #{rotary_pos_embedding.1} parent=1 // loop_exit
      _
    %402 = vsyncpa [#allocation3], 1
    %s403 = scalar_lea.sflag [#allocation3], 1
    %404 = vsyncpa %s403, 1

</llo_original>
